<compile_context>
chip_gen: v6e
topology: v6e:2x2x1
jax: 0.10.0
libtpu: 0.0.40
codegen_flags: <defaults>
</compile_context>

<pallas_src>
import jax
import jax.numpy as jnp
from jax import lax
from jax.experimental import pallas as pl
from jax.experimental.pallas import tpu as pltpu


def graph_encoder_kernel(a_ref,                       # (K*N, N)  stacked A_hat
                         x_ref,                       # (N, Cin)
                         w1_ref, b1_ref,              # (Cin, H), (1, H)
                         w2_ref, b2_ref,              # (H, Cout), (1, Cout)
                         val_ref,                     # (K, 3)
                         dw_ref, db_ref,              # (2*Cout+3, HD), (1, HD)
                         pw_ref, pb_ref,              # (HD, 1), (1, 1)
                         idx_ref,                     # (K, 2) int32 endpoint ids
                         out_ref):                    # (K, 1)
    f32 = jnp.float32
    K = val_ref.shape[0]
    N = a_ref.shape[1]
    Cout = w2_ref.shape[1]

    A_all = a_ref[...]                                # (K*N, N)
    X = x_ref[...]                                    # (N, Cin)

    # (1) k-invariant X @ W1, computed exactly once (hoisted out of per-k work).
    xw1 = jnp.dot(X, w1_ref[...], preferred_element_type=f32)            # (N, H)

    # (2) GCN layer 1 batched over all K edge sets in one MXU push:
    #     relu(A_hat_k @ X W1 + b1) for every k at once.
    h1 = jnp.maximum(
        jnp.dot(A_all, xw1, preferred_element_type=f32) + b1_ref[...], 0.0)  # (K*N, H)

    # (3) GCN layer 2 right matmul batched over k: (H1_k @ W2) for all k.
    hw = jnp.dot(h1, w2_ref[...], preferred_element_type=f32)            # (K*N, Cout)

    # (4) Per-edge-set propagation mu_k = A_hat_k @ (H1_k W2) + b2
    #     (K tiny matmuls, unrolled; only part that cannot be fused batched).
    mu_blocks = []
    for k in range(K):
        mu_k = jnp.dot(A_all[k * N:(k + 1) * N, :],
                       hw[k * N:(k + 1) * N, :],
                       preferred_element_type=f32) + b2_ref[...]         # (N, Cout)
        mu_blocks.append(mu_k)
    mu_all = jnp.concatenate(mu_blocks, axis=0)                          # (K*N, Cout)

    # (5) Gather both endpoint embeddings for every k with two one-hot matmuls
    #     (TPU-friendly gather, batched over k).
    idx = idx_ref[...]                                                   # (K, 2) int32
    col = lax.broadcasted_iota(jnp.int32, (K, K * N), 1)
    row = lax.broadcasted_iota(jnp.int32, (K, K * N), 0)
    sel1 = (col == row * N + idx[:, 0:1]).astype(f32)                    # (K, K*N)
    sel2 = (col == row * N + idx[:, 1:2]).astype(f32)
    g1 = jnp.dot(sel1, mu_all, preferred_element_type=f32)               # (K, Cout)
    g2 = jnp.dot(sel2, mu_all, preferred_element_type=f32)               # (K, Cout)

    # (6) Decoder Linear on concat([g1, g2, value], axis=1) as split matmuls
    #     (algebraically identical), batched over k; then ReLU.
    dw = dw_ref[...]                                                     # (2*Cout+3, HD)
    hidden = (jnp.dot(g1, dw[:Cout, :], preferred_element_type=f32)
              + jnp.dot(g2, dw[Cout:2 * Cout, :], preferred_element_type=f32)
              + jnp.dot(val_ref[...], dw[2 * Cout:, :], preferred_element_type=f32)
              + db_ref[...])
    hidden = jnp.maximum(hidden, 0.0)                                    # (K, HD)

    # (7) Prediction layer + sigmoid; single store of all K predictions.
    logit = jnp.dot(hidden, pw_ref[...], preferred_element_type=f32) + pb_ref[...]
    out_ref[...] = 1.0 / (1.0 + jnp.exp(-logit))                         # (K, 1)


def normalized_adjacency(edge_index, num_nodes):
    """Dense GCN normalization D^-1/2 (A + I) D^-1/2 from a (2, E) edge_index."""
    src, dst = edge_index[0], edge_index[1]
    A = jnp.zeros((num_nodes, num_nodes), jnp.float32).at[dst, src].add(1.0)
    A = A + jnp.eye(num_nodes, dtype=jnp.float32)
    deg = jnp.sum(A, axis=1)
    dinv = jnp.where(deg > 0, lax.rsqrt(deg), 0.0)
    return dinv[:, None] * A * dinv[None, :]


def graph_encoder_pallas(x, a_hats, value, index, params):
    w1, b1, w2, b2, dw, db, pw, pb = params
    K, N, _ = a_hats.shape
    H = w1.shape[1]
    Cout = w2.shape[1]
    HD = dw.shape[1]

    # Stack the K normalized adjacencies along the sublane axis so GCN layer 1
    # is one batched matmul inside the kernel.
    a2d = a_hats.reshape(K * N, N)

    out = pl.pallas_call(
        graph_encoder_kernel,
        out_shape=jax.ShapeDtypeStruct((K, 1), jnp.float32),
        # Grid-less single invocation: every operand is mapped whole into VMEM
        # exactly once (total resident data << VMEM on v5e/v6e/v7x).
    )(a2d, x,
      w1, b1.reshape(1, H),
      w2, b2.reshape(1, Cout),
      value,
      dw, db.reshape(1, HD),
      pw, pb.reshape(1, 1),
      index.astype(jnp.int32))
    return out.reshape(K)


def graph_encoder_reference(x, a_hats, value, index, params):
    """Pure-JAX reference of the PyTorch forward (per edge set)."""
    w1, b1, w2, b2, dw, db, pw, pb = params
    preds = []
    for k in range(a_hats.shape[0]):
        A = a_hats[k]
        h1 = jnp.maximum(A @ (x @ w1) + b1, 0.0)
        mu = A @ (h1 @ w2) + b2
        hidden = jnp.concatenate(
            [mu[index[k, 0]][None, :], mu[index[k, 1]][None, :], value[k:k + 1]], axis=1)
        out = jnp.maximum(hidden @ dw + db, 0.0)
        p = jax.nn.sigmoid(out @ pw + pb)
        preds.append(p.reshape(-1))
    return jnp.concatenate(preds)


if __name__ == "__main__":
    # Small shapes: 16 nodes, enc_in=8, enc_hidden=16, enc_out=8, hidden_dimension=32,
    # K=4 edge sets of 24 edges each, value has 3 features per edge pair.
    N, Cin, H, Cout, HD, K, E = 16, 8, 16, 8, 32, 4, 24

    key = jax.random.PRNGKey(0)
    keys = jax.random.split(key, 16)

    x = jax.random.normal(keys[0], (N, Cin), jnp.float32)

    # K edge sets (no self-loops): dst = (src + nonzero offset) mod N
    src = jax.random.randint(keys[1], (K, E), 0, N)
    offs = jax.random.randint(keys[2], (K, E), 1, N)
    dst = (src + offs) % N
    edge_index = jnp.stack([src, dst], axis=1)                     # (K, 2, E)
    a_hats = jnp.stack([normalized_adjacency(edge_index[k], N) for k in range(K)])

    value = jax.random.normal(keys[3], (K, 3), jnp.float32)
    index = jax.random.randint(keys[4], (K, 2), 0, N).astype(jnp.int32)

    # Deterministic parameter init (GCNConv weights, biases; decoder/pred Linear).
    w1 = 0.2 * jax.random.normal(keys[5], (Cin, H), jnp.float32)
    b1 = 0.1 * jax.random.normal(keys[6], (H,), jnp.float32)
    w2 = 0.2 * jax.random.normal(keys[7], (H, Cout), jnp.float32)
    b2 = 0.1 * jax.random.normal(keys[8], (Cout,), jnp.float32)
    dw = 0.2 * jax.random.normal(keys[9], (2 * Cout + 3, HD), jnp.float32)
    db = 0.1 * jax.random.normal(keys[10], (HD,), jnp.float32)
    pw = 0.2 * jax.random.normal(keys[11], (HD, 1), jnp.float32)
    pb = 0.1 * jax.random.normal(keys[12], (1,), jnp.float32)
    params = (w1, b1, w2, b2, dw, db, pw, pb)

    pred = graph_encoder_pallas(x, a_hats, value, index, params)
    pred = jax.block_until_ready(pred)

    ref = graph_encoder_reference(x, a_hats, value, index, params)
    assert pred.shape == (K,)
    assert jnp.allclose(pred, ref, atol=1e-5, rtol=1e-5), (pred, ref)

    print("KERNEL_OK")
</pallas_src>

<mosaic_0001>
module attributes {stable_mosaic.version = 11 : i64} {
  func.func @graph_encoder_kernel(%arg0: memref<64x16xf32, #tpu.memory_space<vmem>>, %arg1: memref<16x8xf32, #tpu.memory_space<vmem>>, %arg2: memref<8x16xf32, #tpu.memory_space<vmem>>, %arg3: memref<1x16xf32, #tpu.memory_space<vmem>>, %arg4: memref<16x8xf32, #tpu.memory_space<vmem>>, %arg5: memref<1x8xf32, #tpu.memory_space<vmem>>, %arg6: memref<4x3xf32, #tpu.memory_space<vmem>>, %arg7: memref<19x32xf32, #tpu.memory_space<vmem>>, %arg8: memref<1x32xf32, #tpu.memory_space<vmem>>, %arg9: memref<32x1xf32, #tpu.memory_space<vmem>>, %arg10: memref<1x1xf32, #tpu.memory_space<vmem>>, %arg11: memref<4x2xi32, #tpu.memory_space<vmem>>, %arg12: memref<4x1xf32, #tpu.memory_space<vmem>>) attributes {dimension_semantics = [], scalar_prefetch = 0 : i64, scratch_operands = 0 : i64, tpu.core_type = #tpu.core_type<tc>} {
    %c0 = arith.constant 0 : index
    %c0_0 = arith.constant 0 : index
    %0 = vector.load %arg0[%c0, %c0_0] : memref<64x16xf32, #tpu.memory_space<vmem>>, vector<64x16xf32>
    %c0_1 = arith.constant 0 : index
    %c0_2 = arith.constant 0 : index
    %1 = vector.load %arg1[%c0_1, %c0_2] : memref<16x8xf32, #tpu.memory_space<vmem>>, vector<16x8xf32>
    %c0_3 = arith.constant 0 : index
    %c0_4 = arith.constant 0 : index
    %2 = vector.load %arg2[%c0_3, %c0_4] : memref<8x16xf32, #tpu.memory_space<vmem>>, vector<8x16xf32>
    %cst = arith.constant dense<0.000000e+00> : vector<16x16xf32>
    %3 = tpu.matmul %1, %2, %cst {dimension_numbers = #tpu.dot_dimension_numbers<[1], [0], [0], [1], [0, 0, 1, 1], [], []>} : vector<16x8xf32>, vector<8x16xf32>, vector<16x16xf32> -> vector<16x16xf32>
    %cst_5 = arith.constant dense<0.000000e+00> : vector<64x16xf32>
    %4 = tpu.matmul %0, %3, %cst_5 {dimension_numbers = #tpu.dot_dimension_numbers<[1], [0], [0], [1], [0, 0, 1, 1], [], []>} : vector<64x16xf32>, vector<16x16xf32>, vector<64x16xf32> -> vector<64x16xf32>
    %c0_6 = arith.constant 0 : index
    %c0_7 = arith.constant 0 : index
    %5 = vector.load %arg3[%c0_6, %c0_7] : memref<1x16xf32, #tpu.memory_space<vmem>>, vector<1x16xf32>
    %6 = vector.broadcast %5 : vector<1x16xf32> to vector<64x16xf32>
    %7 = arith.addf %4, %6 : vector<64x16xf32>
    %cst_8 = arith.constant 0.000000e+00 : f32
    %8 = vector.broadcast %cst_8 : f32 to vector<64x16xf32>
    %9 = arith.maximumf %7, %8 : vector<64x16xf32>
    %c0_9 = arith.constant 0 : index
    %c0_10 = arith.constant 0 : index
    %10 = vector.load %arg4[%c0_9, %c0_10] : memref<16x8xf32, #tpu.memory_space<vmem>>, vector<16x8xf32>
    %cst_11 = arith.constant dense<0.000000e+00> : vector<64x8xf32>
    %11 = tpu.matmul %9, %10, %cst_11 {dimension_numbers = #tpu.dot_dimension_numbers<[1], [0], [0], [1], [0, 0, 1, 1], [], []>} : vector<64x16xf32>, vector<16x8xf32>, vector<64x8xf32> -> vector<64x8xf32>
    %12 = vector.extract_strided_slice %0 {offsets = [0, 0], sizes = [16, 16], strides = [1, 1]} : vector<64x16xf32> to vector<16x16xf32>
    %13 = vector.extract_strided_slice %11 {offsets = [0, 0], sizes = [16, 8], strides = [1, 1]} : vector<64x8xf32> to vector<16x8xf32>
    %cst_12 = arith.constant dense<0.000000e+00> : vector<16x8xf32>
    %14 = tpu.matmul %12, %13, %cst_12 {dimension_numbers = #tpu.dot_dimension_numbers<[1], [0], [0], [1], [0, 0, 1, 1], [], []>} : vector<16x16xf32>, vector<16x8xf32>, vector<16x8xf32> -> vector<16x8xf32>
    %c0_13 = arith.constant 0 : index
    %c0_14 = arith.constant 0 : index
    %15 = vector.load %arg5[%c0_13, %c0_14] : memref<1x8xf32, #tpu.memory_space<vmem>>, vector<1x8xf32>
    %16 = vector.broadcast %15 : vector<1x8xf32> to vector<16x8xf32>
    %17 = arith.addf %14, %16 : vector<16x8xf32>
    %18 = vector.extract_strided_slice %0 {offsets = [16, 0], sizes = [16, 16], strides = [1, 1]} : vector<64x16xf32> to vector<16x16xf32>
    %19 = vector.extract_strided_slice %11 {offsets = [16, 0], sizes = [16, 8], strides = [1, 1]} : vector<64x8xf32> to vector<16x8xf32>
    %cst_15 = arith.constant dense<0.000000e+00> : vector<16x8xf32>
    %20 = tpu.matmul %18, %19, %cst_15 {dimension_numbers = #tpu.dot_dimension_numbers<[1], [0], [0], [1], [0, 0, 1, 1], [], []>} : vector<16x16xf32>, vector<16x8xf32>, vector<16x8xf32> -> vector<16x8xf32>
    %c0_16 = arith.constant 0 : index
    %c0_17 = arith.constant 0 : index
    %21 = vector.load %arg5[%c0_16, %c0_17] : memref<1x8xf32, #tpu.memory_space<vmem>>, vector<1x8xf32>
    %22 = vector.broadcast %21 : vector<1x8xf32> to vector<16x8xf32>
    %23 = arith.addf %20, %22 : vector<16x8xf32>
    %24 = vector.extract_strided_slice %0 {offsets = [32, 0], sizes = [16, 16], strides = [1, 1]} : vector<64x16xf32> to vector<16x16xf32>
    %25 = vector.extract_strided_slice %11 {offsets = [32, 0], sizes = [16, 8], strides = [1, 1]} : vector<64x8xf32> to vector<16x8xf32>
    %cst_18 = arith.constant dense<0.000000e+00> : vector<16x8xf32>
    %26 = tpu.matmul %24, %25, %cst_18 {dimension_numbers = #tpu.dot_dimension_numbers<[1], [0], [0], [1], [0, 0, 1, 1], [], []>} : vector<16x16xf32>, vector<16x8xf32>, vector<16x8xf32> -> vector<16x8xf32>
    %c0_19 = arith.constant 0 : index
    %c0_20 = arith.constant 0 : index
    %27 = vector.load %arg5[%c0_19, %c0_20] : memref<1x8xf32, #tpu.memory_space<vmem>>, vector<1x8xf32>
    %28 = vector.broadcast %27 : vector<1x8xf32> to vector<16x8xf32>
    %29 = arith.addf %26, %28 : vector<16x8xf32>
    %30 = vector.extract_strided_slice %0 {offsets = [48, 0], sizes = [16, 16], strides = [1, 1]} : vector<64x16xf32> to vector<16x16xf32>
    %31 = vector.extract_strided_slice %11 {offsets = [48, 0], sizes = [16, 8], strides = [1, 1]} : vector<64x8xf32> to vector<16x8xf32>
    %cst_21 = arith.constant dense<0.000000e+00> : vector<16x8xf32>
    %32 = tpu.matmul %30, %31, %cst_21 {dimension_numbers = #tpu.dot_dimension_numbers<[1], [0], [0], [1], [0, 0, 1, 1], [], []>} : vector<16x16xf32>, vector<16x8xf32>, vector<16x8xf32> -> vector<16x8xf32>
    %c0_22 = arith.constant 0 : index
    %c0_23 = arith.constant 0 : index
    %33 = vector.load %arg5[%c0_22, %c0_23] : memref<1x8xf32, #tpu.memory_space<vmem>>, vector<1x8xf32>
    %34 = vector.broadcast %33 : vector<1x8xf32> to vector<16x8xf32>
    %35 = arith.addf %32, %34 : vector<16x8xf32>
    %36 = tpu.concatenate %17, %23, %29, %35 in 0 : vector<16x8xf32>, vector<16x8xf32>, vector<16x8xf32>, vector<16x8xf32> -> vector<64x8xf32>
    %c0_24 = arith.constant 0 : index
    %c0_25 = arith.constant 0 : index
    %37 = vector.load %arg11[%c0_24, %c0_25] : memref<4x2xi32, #tpu.memory_space<vmem>>, vector<4x2xi32>
    %38 = tpu.iota {dimensions = array<i32: 1>} : vector<4x64xi32>
    %39 = tpu.iota {dimensions = array<i32: 0>} : vector<4x64xi32>
    %c16_i32 = arith.constant 16 : i32
    %40 = vector.broadcast %c16_i32 : i32 to vector<4x64xi32>
    %41 = arith.muli %39, %40 : vector<4x64xi32>
    %42 = vector.extract_strided_slice %37 {offsets = [0, 0], sizes = [4, 1], strides = [1, 1]} : vector<4x2xi32> to vector<4x1xi32>
    %43 = vector.broadcast %42 : vector<4x1xi32> to vector<4x64xi32>
    %44 = arith.addi %41, %43 : vector<4x64xi32>
    %45 = arith.cmpi eq, %38, %44 : vector<4x64xi32>
    %46 = arith.extui %45 : vector<4x64xi1> to vector<4x64xi32>
    %47 = arith.sitofp %46 : vector<4x64xi32> to vector<4x64xf32>
    %c16_i32_26 = arith.constant 16 : i32
    %48 = vector.broadcast %c16_i32_26 : i32 to vector<4x64xi32>
    %49 = arith.muli %39, %48 : vector<4x64xi32>
    %50 = vector.extract_strided_slice %37 {offsets = [0, 1], sizes = [4, 1], strides = [1, 1]} : vector<4x2xi32> to vector<4x1xi32>
    %51 = vector.broadcast %50 : vector<4x1xi32> to vector<4x64xi32>
    %52 = arith.addi %49, %51 : vector<4x64xi32>
    %53 = arith.cmpi eq, %38, %52 : vector<4x64xi32>
    %54 = arith.extui %53 : vector<4x64xi1> to vector<4x64xi32>
    %55 = arith.sitofp %54 : vector<4x64xi32> to vector<4x64xf32>
    %cst_27 = arith.constant dense<0.000000e+00> : vector<4x8xf32>
    %56 = tpu.matmul %47, %36, %cst_27 {dimension_numbers = #tpu.dot_dimension_numbers<[1], [0], [0], [1], [0, 0, 1, 1], [], []>} : vector<4x64xf32>, vector<64x8xf32>, vector<4x8xf32> -> vector<4x8xf32>
    %cst_28 = arith.constant dense<0.000000e+00> : vector<4x8xf32>
    %57 = tpu.matmul %55, %36, %cst_28 {dimension_numbers = #tpu.dot_dimension_numbers<[1], [0], [0], [1], [0, 0, 1, 1], [], []>} : vector<4x64xf32>, vector<64x8xf32>, vector<4x8xf32> -> vector<4x8xf32>
    %c0_29 = arith.constant 0 : index
    %c0_30 = arith.constant 0 : index
    %58 = vector.load %arg7[%c0_29, %c0_30] : memref<19x32xf32, #tpu.memory_space<vmem>>, vector<19x32xf32>
    %59 = vector.extract_strided_slice %58 {offsets = [0, 0], sizes = [8, 32], strides = [1, 1]} : vector<19x32xf32> to vector<8x32xf32>
    %cst_31 = arith.constant dense<0.000000e+00> : vector<4x32xf32>
    %60 = tpu.matmul %56, %59, %cst_31 {dimension_numbers = #tpu.dot_dimension_numbers<[1], [0], [0], [1], [0, 0, 1, 1], [], []>} : vector<4x8xf32>, vector<8x32xf32>, vector<4x32xf32> -> vector<4x32xf32>
    %61 = vector.extract_strided_slice %58 {offsets = [8, 0], sizes = [8, 32], strides = [1, 1]} : vector<19x32xf32> to vector<8x32xf32>
    %cst_32 = arith.constant dense<0.000000e+00> : vector<4x32xf32>
    %62 = tpu.matmul %57, %61, %cst_32 {dimension_numbers = #tpu.dot_dimension_numbers<[1], [0], [0], [1], [0, 0, 1, 1], [], []>} : vector<4x8xf32>, vector<8x32xf32>, vector<4x32xf32> -> vector<4x32xf32>
    %63 = arith.addf %60, %62 : vector<4x32xf32>
    %c0_33 = arith.constant 0 : index
    %c0_34 = arith.constant 0 : index
    %64 = vector.load %arg6[%c0_33, %c0_34] : memref<4x3xf32, #tpu.memory_space<vmem>>, vector<4x3xf32>
    %65 = vector.extract_strided_slice %58 {offsets = [16, 0], sizes = [3, 32], strides = [1, 1]} : vector<19x32xf32> to vector<3x32xf32>
    %cst_35 = arith.constant dense<0.000000e+00> : vector<4x32xf32>
    %66 = tpu.matmul %64, %65, %cst_35 {dimension_numbers = #tpu.dot_dimension_numbers<[1], [0], [0], [1], [0, 0, 1, 1], [], []>} : vector<4x3xf32>, vector<3x32xf32>, vector<4x32xf32> -> vector<4x32xf32>
    %67 = arith.addf %63, %66 : vector<4x32xf32>
    %c0_36 = arith.constant 0 : index
    %c0_37 = arith.constant 0 : index
    %68 = vector.load %arg8[%c0_36, %c0_37] : memref<1x32xf32, #tpu.memory_space<vmem>>, vector<1x32xf32>
    %69 = vector.broadcast %68 : vector<1x32xf32> to vector<4x32xf32>
    %70 = arith.addf %67, %69 : vector<4x32xf32>
    %cst_38 = arith.constant 0.000000e+00 : f32
    %71 = vector.broadcast %cst_38 : f32 to vector<4x32xf32>
    %72 = arith.maximumf %70, %71 : vector<4x32xf32>
    %c0_39 = arith.constant 0 : index
    %c0_40 = arith.constant 0 : index
    %73 = vector.load %arg9[%c0_39, %c0_40] : memref<32x1xf32, #tpu.memory_space<vmem>>, vector<32x1xf32>
    %cst_41 = arith.constant dense<0.000000e+00> : vector<4x1xf32>
    %74 = tpu.matmul %72, %73, %cst_41 {dimension_numbers = #tpu.dot_dimension_numbers<[1], [0], [0], [1], [0, 0, 1, 1], [], []>} : vector<4x32xf32>, vector<32x1xf32>, vector<4x1xf32> -> vector<4x1xf32>
    %c0_42 = arith.constant 0 : index
    %c0_43 = arith.constant 0 : index
    %75 = vector.load %arg10[%c0_42, %c0_43] : memref<1x1xf32, #tpu.memory_space<vmem>>, vector<1x1xf32>
    %76 = vector.broadcast %75 : vector<1x1xf32> to vector<4x1xf32>
    %77 = arith.addf %74, %76 : vector<4x1xf32>
    %cst_44 = arith.constant 0.000000e+00 : f32
    %78 = vector.broadcast %cst_44 : f32 to vector<4x1xf32>
    %79 = arith.subf %78, %77 : vector<4x1xf32>
    %80 = math.exp %79 : vector<4x1xf32>
    %cst_45 = arith.constant 1.000000e+00 : f32
    %81 = vector.broadcast %cst_45 : f32 to vector<4x1xf32>
    %82 = arith.addf %81, %80 : vector<4x1xf32>
    %cst_46 = arith.constant 1.000000e+00 : f32
    %83 = vector.broadcast %cst_46 : f32 to vector<4x1xf32>
    %84 = arith.divf %83, %82 : vector<4x1xf32>
    %c0_47 = arith.constant 0 : index
    %c0_48 = arith.constant 0 : index
    %85 = vector.load %arg12[%c0_47, %c0_48] : memref<4x1xf32, #tpu.memory_space<vmem>>, vector<4x1xf32>
    tpu.vector_store %arg12[%c0_47, %c0_48], %84 {strides = array<i32>} : memref<4x1xf32, #tpu.memory_space<vmem>>, vector<4x1xf32>,
    return
  }
}

</mosaic_0001>

<llo_original>
// kernel: tpu_custom_call.1
$region0: #{tpu_custom_call.1}
  #allocation0 [shape = 'u32[]', space=smem, size = 0x4, offset = 0x4, fixed_abs, tag = 'smem constant byte address 0x4 - core index']
  #allocation1 [shape = 'u32[144,128]{1,0:T(1,128)}', space=vmem, size = 0x12000, scoped, tag = 'internal scratch']
  #allocation2 [shape = 'f32[1,1]{1,0:T(1,128)S(1)}', space=vmem, size = 0x200, scoped, tag = 'scoped memory for tpu_custom_call.1']
  %s0 = inlined_call_operand.vmem [shape: f32[64,16], index: 0, kind: input, shape index: {}]
  %s1 = inlined_call_operand.vmem [shape: f32[16,8], index: 1, kind: input, shape index: {}]
  %s2 = inlined_call_operand.vmem [shape: f32[8,16], index: 2, kind: input, shape index: {}]
  %s3 = inlined_call_operand.vmem [shape: f32[1,16], index: 3, kind: input, shape index: {}]
  %s4 = inlined_call_operand.vmem [shape: f32[16,8], index: 4, kind: input, shape index: {}]
  %s5 = inlined_call_operand.vmem [shape: f32[1,8], index: 5, kind: input, shape index: {}]
  %s6 = inlined_call_operand.vmem [shape: f32[4,3], index: 6, kind: input, shape index: {}]
  %s7 = inlined_call_operand.vmem [shape: f32[19,32], index: 7, kind: input, shape index: {}]
  %s8 = inlined_call_operand.vmem [shape: f32[1,32], index: 8, kind: input, shape index: {}]
  %s9 = inlined_call_operand.vmem [shape: f32[32,1], index: 9, kind: input, shape index: {}]
  %s10 = inlined_call_operand.<no memory space> [shape: f32[1,1], index: 10, kind: input, shape index: {}]
  %s11 = inlined_call_operand.vmem [shape: s32[4,2], index: 11, kind: input, shape index: {}]
  %s12 = inlined_call_operand.vmem [shape: f32[4,1], index: 12, kind: output, shape index: {}]
  %s13 = sld [smem:[#allocation0]]
  $region58: #{tpu_custom_call.1} parent=0
    _
  %s15 = ssub.s32 1, %s13
  %s16 = scalar_select 0, %s15, %s13
  %v17 = vstv %s10
  %18 = vst [vmem:[#allocation2] sm:$0x1] %v17
  // Predicated region
  $region2: #{tpu_custom_call.1} parent=0 // pred_check
    _
  $region3: #{tpu_custom_call.1} parent=0 // pred_check_branch
    %20 = sbr.rel (0) target = $region5
  $region4: #{tpu_custom_call.1} parent=0 // pred_region
    _
  $region5: #{tpu_custom_call.1} parent=0 // pred_fallthru
    _
  // Predicated region
  $region6: #{tpu_custom_call.1} parent=0 // pred_check
    _
  $region7: #{tpu_custom_call.1} parent=0 // pred_check_branch
    %22 = sbr.rel (0) target = $region9
  $region8: #{tpu_custom_call.1} parent=0 // pred_region
    _
  $region9: #{tpu_custom_call.1} parent=0 // pred_fallthru
    _
  // Predicated region
  $region10: #{tpu_custom_call.1} parent=0 // pred_check
    _
  $region11: #{tpu_custom_call.1} parent=0 // pred_check_branch
    %24 = sbr.rel (0) target = $region13
  $region12: #{tpu_custom_call.1} parent=0 // pred_region
    _
  $region13: #{tpu_custom_call.1} parent=0 // pred_fallthru
    _
  // Predicated region
  $region14: #{tpu_custom_call.1} parent=0 // pred_check
    _
  $region15: #{tpu_custom_call.1} parent=0 // pred_check_branch
    %26 = sbr.rel (0) target = $region17
  $region16: #{tpu_custom_call.1} parent=0 // pred_region
    _
  $region17: #{tpu_custom_call.1} parent=0 // pred_fallthru
    _
  // Predicated region
  $region18: #{tpu_custom_call.1} parent=0 // pred_check
    _
  $region19: #{tpu_custom_call.1} parent=0 // pred_check_branch
    %28 = sbr.rel (0) target = $region21
  $region20: #{tpu_custom_call.1} parent=0 // pred_region
    _
  $region21: #{tpu_custom_call.1} parent=0 // pred_fallthru
    _
  // Predicated region
  $region22: #{tpu_custom_call.1} parent=0 // pred_check
    _
  $region23: #{tpu_custom_call.1} parent=0 // pred_check_branch
    %30 = sbr.rel (0) target = $region25
  $region24: #{tpu_custom_call.1} parent=0 // pred_region
    _
  $region25: #{tpu_custom_call.1} parent=0 // pred_fallthru
    _
  // Predicated region
  $region26: #{tpu_custom_call.1} parent=0 // pred_check
    _
  $region27: #{tpu_custom_call.1} parent=0 // pred_check_branch
    %32 = sbr.rel (0) target = $region29
  $region28: #{tpu_custom_call.1} parent=0 // pred_region
    _
  $region29: #{tpu_custom_call.1} parent=0 // pred_fallthru
    _
  // Predicated region
  $region30: #{tpu_custom_call.1} parent=0 // pred_check
    _
  $region31: #{tpu_custom_call.1} parent=0 // pred_check_branch
    %34 = sbr.rel (0) target = $region33
  $region32: #{tpu_custom_call.1} parent=0 // pred_region
    _
  $region33: #{tpu_custom_call.1} parent=0 // pred_fallthru
    _
  // Predicated region
  $region34: #{tpu_custom_call.1} parent=0 // pred_check
    _
  $region35: #{tpu_custom_call.1} parent=0 // pred_check_branch
    %36 = sbr.rel (0) target = $region37
  $region36: #{tpu_custom_call.1} parent=0 // pred_region
    _
  $region37: #{tpu_custom_call.1} parent=0 // pred_fallthru
    _
  // Predicated region
  $region38: #{tpu_custom_call.1} parent=0 // pred_check
    _
  $region39: #{tpu_custom_call.1} parent=0 // pred_check_branch
    %38 = sbr.rel (0) target = $region41
  $region40: #{tpu_custom_call.1} parent=0 // pred_region
    _
  $region41: #{tpu_custom_call.1} parent=0 // pred_fallthru
    _
  // Predicated region
  $region42: #{tpu_custom_call.1} parent=0 // pred_check
    _
  $region43: #{tpu_custom_call.1} parent=0 // pred_check_branch
    %40 = sbr.rel (0) target = $region45
  $region44: #{tpu_custom_call.1} parent=0 // pred_region
    _
  $region45: #{tpu_custom_call.1} parent=0 // pred_fallthru
    _
  // Predicated region
  $region46: #{tpu_custom_call.1} parent=0 // pred_check
    _
  $region47: #{tpu_custom_call.1} parent=0 // pred_check_branch
    %42 = sbr.rel (0) target = $region49
  $region48: #{tpu_custom_call.1} parent=0 // pred_region
    _
  $region49: #{tpu_custom_call.1} parent=0 // pred_fallthru
    _
  %v43 = vld [vmem:[%s0] sm:$0xff]
  %v44 = vld [vmem:[%s0 + $0x8] sm:$0xff]
  %v45 = vld [vmem:[%s0 + $0x10] sm:$0xff]
  %v46 = vld [vmem:[%s0 + $0x18] sm:$0xff]
  %v47 = vld [vmem:[%s0 + $0x20] sm:$0xff]
  %v48 = vld [vmem:[%s0 + $0x28] sm:$0xff]
  %v49 = vld [vmem:[%s0 + $0x30] sm:$0xff]
  %v50 = vld [vmem:[%s0 + $0x38] sm:$0xff]
  %v51 = vld [vmem:[%s1] sm:$0xff]
  %v52 = vld [vmem:[%s1 + $0x8] sm:$0xff]
  %v53 = vld [vmem:[%s2] sm:$0xff]
  %vm54 = vcmask 64512
  %v56 = vsel %vm54, %v51, 0
  %v59 = vsel %vm54, %v52, 0
  %61 = vmatprep.subr.mxu0 0.0
  %62 = vmatpush1.msra.mxu0 0.0
  %63 = vmatprep.subr.mxu0 0.0
  %64 = vmatpush1.msra.mxu0 0.0
  %65 = vmatprep.subr.mxu0 0.0
  %66 = vmatpush1.msra.mxu0 0.0
  %67 = vmatprep.subr.mxu0 0.0
  %68 = vmatpush1.msra.mxu0 0.0
  %69 = vmatprep.subr.mxu0 0.0
  %70 = vmatpush1.msra.mxu0 0.0
  %71 = vmatprep.subr.mxu0 0.0
  %72 = vmatpush1.msra.mxu0 0.0
  %73 = vmatprep.subr.mxu0 0.0
  %74 = vmatpush1.msra.mxu0 0.0
  %75 = vmatprep.subr.mxu0 0.0
  %76 = vmatpush1.msra.mxu0 0.0
  %77 = vmatprep.subr.mxu0 0.0
  %78 = vmatpush1.msra.mxu0 0.0
  %79 = vmatprep.subr.mxu0 0.0
  %80 = vmatpush1.msra.mxu0 0.0
  %81 = vmatprep.subr.mxu0 0.0
  %82 = vmatpush1.msra.mxu0 0.0
  %83 = vmatprep.subr.mxu0 0.0
  %84 = vmatpush1.msra.mxu0 0.0
  %85 = vmatprep.subr.mxu0 0.0
  %86 = vmatpush1.msra.mxu0 0.0
  %87 = vmatprep.subr.mxu0 0.0
  %88 = vmatpush1.msra.mxu0 0.0
  %89 = vmatprep.subr.mxu0 0.0
  %90 = vmatpush1.msra.mxu0 0.0
  %91 = vmatprep.subr.mxu0 0.0
  %92 = vmatpush1.msra.mxu0 %v53
  %93 = vmatprep.subr.mxu0 0.0
  %94 = vmatpush2.msra.mxu0 0.0
  %95 = vmatprep.subr.mxu0 0.0
  %96 = vmatpush2.msra.mxu0 0.0
  %97 = vmatprep.subr.mxu0 0.0
  %98 = vmatpush2.msra.mxu0 0.0
  %99 = vmatprep.subr.mxu0 0.0
  %100 = vmatpush2.msra.mxu0 0.0
  %101 = vmatprep.subr.mxu0 0.0
  %102 = vmatpush2.msra.mxu0 0.0
  %103 = vmatprep.subr.mxu0 0.0
  %104 = vmatpush2.msra.mxu0 0.0
  %105 = vmatprep.subr.mxu0 0.0
  %106 = vmatpush2.msra.mxu0 0.0
  %107 = vmatprep.subr.mxu0 0.0
  %108 = vmatpush2.msra.mxu0 0.0
  %109 = vmatprep.subr.mxu0 0.0
  %110 = vmatpush2.msra.mxu0 0.0
  %111 = vmatprep.subr.mxu0 0.0
  %112 = vmatpush2.msra.mxu0 0.0
  %113 = vmatprep.subr.mxu0 0.0
  %114 = vmatpush2.msra.mxu0 0.0
  %115 = vmatprep.subr.mxu0 0.0
  %116 = vmatpush2.msra.mxu0 0.0
  %117 = vmatprep.subr.mxu0 0.0
  %118 = vmatpush2.msra.mxu0 0.0
  %119 = vmatprep.subr.mxu0 0.0
  %120 = vmatpush2.msra.mxu0 0.0
  %121 = vmatprep.subr.mxu0 0.0
  %122 = vmatpush2.msra.mxu0 0.0
  %123 = vmatprep.subr.mxu0 0.0
  %124 = vmatpush2.msra.mxu0 0.0
  %125 = vmatprep.mubr.f32.mxu0 0.0
  %126 = vmatmul.mubr.f32.gmra.mxu0 %v56
  %v127 = vpop.f32.mrf.mxu0
  %v128 = vadd.f32 0.0, %v127
  %v129 = vpop.f32.mrf.mxu0
  %130 = vmatprep.mubr.f32.mxu0 0.0
  %131 = vmatmul.mubr.f32.gmra.mxu0 %v59
  %v132 = vpop.f32.mrf.mxu0
  %v133 = vadd.f32 0.0, %v132
  %v134 = vpop.f32.mrf.mxu0
  %135 = vdwg.mxu0
  %v136 = vld [vmem:[%s3] sm:$0x1]
  %v138 = vlaneseq
  %v139 = vshrl.u32 %v138, 7
  %v140 = vsub.s32 0, %v139
  %v141 = vrot.slane %v136, %v140
  %vm143 = vcmask 130048
  %v145 = vsel %vm143, %v43, 0
  %v148 = vsel %vm143, %v44, 0
  %v151 = vsel %vm143, %v45, 0
  %v154 = vsel %vm143, %v46, 0
  %v157 = vsel %vm143, %v47, 0
  %v160 = vsel %vm143, %v48, 0
  %v163 = vsel %vm143, %v49, 0
  %v166 = vsel %vm143, %v50, 0
  %168 = vmatprep.subr.mxu0 0.0
  %169 = vmatpush1.msra.mxu0 0.0
  %170 = vmatprep.subr.mxu0 0.0
  %171 = vmatpush1.msra.mxu0 0.0
  %172 = vmatprep.subr.mxu0 0.0
  %173 = vmatpush1.msra.mxu0 0.0
  %174 = vmatprep.subr.mxu0 0.0
  %175 = vmatpush1.msra.mxu0 0.0
  %176 = vmatprep.subr.mxu0 0.0
  %177 = vmatpush1.msra.mxu0 0.0
  %178 = vmatprep.subr.mxu0 0.0
  %179 = vmatpush1.msra.mxu0 0.0
  %180 = vmatprep.subr.mxu0 0.0
  %181 = vmatpush1.msra.mxu0 0.0
  %182 = vmatprep.subr.mxu0 0.0
  %183 = vmatpush1.msra.mxu0 0.0
  %184 = vmatprep.subr.mxu0 0.0
  %185 = vmatpush1.msra.mxu0 0.0
  %186 = vmatprep.subr.mxu0 0.0
  %187 = vmatpush1.msra.mxu0 0.0
  %188 = vmatprep.subr.mxu0 0.0
  %189 = vmatpush1.msra.mxu0 0.0
  %190 = vmatprep.subr.mxu0 0.0
  %191 = vmatpush1.msra.mxu0 0.0
  %192 = vmatprep.subr.mxu0 0.0
  %193 = vmatpush1.msra.mxu0 0.0
  %194 = vmatprep.subr.mxu0 0.0
  %195 = vmatpush1.msra.mxu0 0.0
  %196 = vmatprep.subr.mxu0 0.0
  %197 = vmatpush1.msra.mxu0 %v133
  %198 = vmatprep.subr.mxu0 0.0
  %199 = vmatpush1.msra.mxu0 %v128
  %200 = vmatprep.subr.mxu0 0.0
  %201 = vmatpush2.msra.mxu0 0.0
  %202 = vmatprep.subr.mxu0 0.0
  %203 = vmatpush2.msra.mxu0 0.0
  %204 = vmatprep.subr.mxu0 0.0
  %205 = vmatpush2.msra.mxu0 0.0
  %206 = vmatprep.subr.mxu0 0.0
  %207 = vmatpush2.msra.mxu0 0.0
  %208 = vmatprep.subr.mxu0 0.0
  %209 = vmatpush2.msra.mxu0 0.0
  %210 = vmatprep.subr.mxu0 0.0
  %211 = vmatpush2.msra.mxu0 0.0
  %212 = vmatprep.subr.mxu0 0.0
  %213 = vmatpush2.msra.mxu0 0.0
  %214 = vmatprep.subr.mxu0 0.0
  %215 = vmatpush2.msra.mxu0 0.0
  %216 = vmatprep.subr.mxu0 0.0
  %217 = vmatpush2.msra.mxu0 0.0
  %218 = vmatprep.subr.mxu0 0.0
  %219 = vmatpush2.msra.mxu0 0.0
  %220 = vmatprep.subr.mxu0 0.0
  %221 = vmatpush2.msra.mxu0 0.0
  %222 = vmatprep.subr.mxu0 0.0
  %223 = vmatpush2.msra.mxu0 0.0
  %224 = vmatprep.subr.mxu0 0.0
  %225 = vmatpush2.msra.mxu0 0.0
  %226 = vmatprep.subr.mxu0 0.0
  %227 = vmatpush2.msra.mxu0 0.0
  %228 = vmatprep.subr.mxu0 0.0
  %229 = vmatpush2.msra.mxu0 0.0
  %230 = vmatprep.subr.mxu0 0.0
  %231 = vmatpush2.msra.mxu0 0.0
  %232 = vmatprep.mubr.f32.mxu0 0.0
  %233 = vmatmul.mubr.f32.gmra.mxu0 %v145
  %v234 = vpop.f32.mrf.mxu0
  %v235 = vadd.f32 %v141, %v234
  %v236 = vpop.f32.mrf.mxu0
  %237 = vmatprep.mubr.f32.mxu0 0.0
  %238 = vmatmul.mubr.f32.gmra.mxu0 %v148
  %v239 = vpop.f32.mrf.mxu0
  %v240 = vadd.f32 %v141, %v239
  %v241 = vpop.f32.mrf.mxu0
  %242 = vmatprep.mubr.f32.mxu0 0.0
  %243 = vmatmul.mubr.f32.gmra.mxu0 %v151
  %v244 = vpop.f32.mrf.mxu0
  %v245 = vadd.f32 %v141, %v244
  %v246 = vpop.f32.mrf.mxu0
  %247 = vmatprep.mubr.f32.mxu0 0.0
  %248 = vmatmul.mubr.f32.gmra.mxu0 %v154
  %v249 = vpop.f32.mrf.mxu0
  %v250 = vadd.f32 %v141, %v249
  %v251 = vpop.f32.mrf.mxu0
  %252 = vmatprep.mubr.f32.mxu0 0.0
  %253 = vmatmul.mubr.f32.gmra.mxu0 %v157
  %v254 = vpop.f32.mrf.mxu0
  %v255 = vadd.f32 %v141, %v254
  %v256 = vpop.f32.mrf.mxu0
  %257 = vmatprep.mubr.f32.mxu0 0.0
  %258 = vmatmul.mubr.f32.gmra.mxu0 %v160
  %v259 = vpop.f32.mrf.mxu0
  %v260 = vadd.f32 %v141, %v259
  %v261 = vpop.f32.mrf.mxu0
  %262 = vmatprep.mubr.f32.mxu0 0.0
  %263 = vmatmul.mubr.f32.gmra.mxu0 %v163
  %v264 = vpop.f32.mrf.mxu0
  %v265 = vadd.f32 %v141, %v264
  %v266 = vpop.f32.mrf.mxu0
  %267 = vmatprep.mubr.f32.mxu0 0.0
  %268 = vmatmul.mubr.f32.gmra.mxu0 %v166
  %v269 = vpop.f32.mrf.mxu0
  %v270 = vadd.f32 %v141, %v269
  %v271 = vpop.f32.mrf.mxu0
  %272 = vdwg.mxu0
  %v273 = vmax.f32 %v235, 0.0
  %v274 = vmax.f32 %v240, 0.0
  %v275 = vmax.f32 %v245, 0.0
  %v276 = vmax.f32 %v250, 0.0
  %v277 = vmax.f32 %v255, 0.0
  %v278 = vmax.f32 %v260, 0.0
  %v279 = vmax.f32 %v265, 0.0
  %v280 = vmax.f32 %v270, 0.0
  %v281 = vld [vmem:[%s4] sm:$0xff]
  %v282 = vld [vmem:[%s4 + $0x8] sm:$0xff]
  %v284 = vsel %vm143, %v273, 0
  %v287 = vsel %vm143, %v274, 0
  %v290 = vsel %vm143, %v275, 0
  %v293 = vsel %vm143, %v276, 0
  %v296 = vsel %vm143, %v277, 0
  %v299 = vsel %vm143, %v278, 0
  %v302 = vsel %vm143, %v279, 0
  %v305 = vsel %vm143, %v280, 0
  %307 = vmatprep.subr.mxu0 0.0
  %308 = vmatpush1.msra.mxu0 0.0
  %309 = vmatprep.subr.mxu0 0.0
  %310 = vmatpush1.msra.mxu0 0.0
  %311 = vmatprep.subr.mxu0 0.0
  %312 = vmatpush1.msra.mxu0 0.0
  %313 = vmatprep.subr.mxu0 0.0
  %314 = vmatpush1.msra.mxu0 0.0
  %315 = vmatprep.subr.mxu0 0.0
  %316 = vmatpush1.msra.mxu0 0.0
  %317 = vmatprep.subr.mxu0 0.0
  %318 = vmatpush1.msra.mxu0 0.0
  %319 = vmatprep.subr.mxu0 0.0
  %320 = vmatpush1.msra.mxu0 0.0
  %321 = vmatprep.subr.mxu0 0.0
  %322 = vmatpush1.msra.mxu0 0.0
  %323 = vmatprep.subr.mxu0 0.0
  %324 = vmatpush1.msra.mxu0 0.0
  %325 = vmatprep.subr.mxu0 0.0
  %326 = vmatpush1.msra.mxu0 0.0
  %327 = vmatprep.subr.mxu0 0.0
  %328 = vmatpush1.msra.mxu0 0.0
  %329 = vmatprep.subr.mxu0 0.0
  %330 = vmatpush1.msra.mxu0 0.0
  %331 = vmatprep.subr.mxu0 0.0
  %332 = vmatpush1.msra.mxu0 0.0
  %333 = vmatprep.subr.mxu0 0.0
  %334 = vmatpush1.msra.mxu0 0.0
  %335 = vmatprep.subr.mxu0 0.0
  %336 = vmatpush1.msra.mxu0 %v282
  %337 = vmatprep.subr.mxu0 0.0
  %338 = vmatpush1.msra.mxu0 %v281
  %339 = vmatprep.subr.mxu0 0.0
  %340 = vmatpush2.msra.mxu0 0.0
  %341 = vmatprep.subr.mxu0 0.0
  %342 = vmatpush2.msra.mxu0 0.0
  %343 = vmatprep.subr.mxu0 0.0
  %344 = vmatpush2.msra.mxu0 0.0
  %345 = vmatprep.subr.mxu0 0.0
  %346 = vmatpush2.msra.mxu0 0.0
  %347 = vmatprep.subr.mxu0 0.0
  %348 = vmatpush2.msra.mxu0 0.0
  %349 = vmatprep.subr.mxu0 0.0
  %350 = vmatpush2.msra.mxu0 0.0
  %351 = vmatprep.subr.mxu0 0.0
  %352 = vmatpush2.msra.mxu0 0.0
  %353 = vmatprep.subr.mxu0 0.0
  %354 = vmatpush2.msra.mxu0 0.0
  %355 = vmatprep.subr.mxu0 0.0
  %356 = vmatpush2.msra.mxu0 0.0
  %357 = vmatprep.subr.mxu0 0.0
  %358 = vmatpush2.msra.mxu0 0.0
  %359 = vmatprep.subr.mxu0 0.0
  %360 = vmatpush2.msra.mxu0 0.0
  %361 = vmatprep.subr.mxu0 0.0
  %362 = vmatpush2.msra.mxu0 0.0
  %363 = vmatprep.subr.mxu0 0.0
  %364 = vmatpush2.msra.mxu0 0.0
  %365 = vmatprep.subr.mxu0 0.0
  %366 = vmatpush2.msra.mxu0 0.0
  %367 = vmatprep.subr.mxu0 0.0
  %368 = vmatpush2.msra.mxu0 0.0
  %369 = vmatprep.subr.mxu0 0.0
  %370 = vmatpush2.msra.mxu0 0.0
  %371 = vmatprep.mubr.f32.mxu0 0.0
  %372 = vmatmul.mubr.f32.gmra.mxu0 %v284
  %v373 = vpop.f32.mrf.mxu0
  %v374 = vadd.f32 0.0, %v373
  %v375 = vpop.f32.mrf.mxu0
  %376 = vmatprep.mubr.f32.mxu0 0.0
  %377 = vmatmul.mubr.f32.gmra.mxu0 %v287
  %v378 = vpop.f32.mrf.mxu0
  %v379 = vadd.f32 0.0, %v378
  %v380 = vpop.f32.mrf.mxu0
  %381 = vmatprep.mubr.f32.mxu0 0.0
  %382 = vmatmul.mubr.f32.gmra.mxu0 %v290
  %v383 = vpop.f32.mrf.mxu0
  %v384 = vadd.f32 0.0, %v383
  %v385 = vpop.f32.mrf.mxu0
  %386 = vmatprep.mubr.f32.mxu0 0.0
  %387 = vmatmul.mubr.f32.gmra.mxu0 %v293
  %v388 = vpop.f32.mrf.mxu0
  %v389 = vadd.f32 0.0, %v388
  %v390 = vpop.f32.mrf.mxu0
  %391 = vmatprep.mubr.f32.mxu0 0.0
  %392 = vmatmul.mubr.f32.gmra.mxu0 %v296
  %v393 = vpop.f32.mrf.mxu0
  %v394 = vadd.f32 0.0, %v393
  %v395 = vpop.f32.mrf.mxu0
  %396 = vmatprep.mubr.f32.mxu0 0.0
  %397 = vmatmul.mubr.f32.gmra.mxu0 %v299
  %v398 = vpop.f32.mrf.mxu0
  %v399 = vadd.f32 0.0, %v398
  %v400 = vpop.f32.mrf.mxu0
  %401 = vmatprep.mubr.f32.mxu0 0.0
  %402 = vmatmul.mubr.f32.gmra.mxu0 %v302
  %v403 = vpop.f32.mrf.mxu0
  %v404 = vadd.f32 0.0, %v403
  %v405 = vpop.f32.mrf.mxu0
  %406 = vmatprep.mubr.f32.mxu0 0.0
  %407 = vmatmul.mubr.f32.gmra.mxu0 %v305
  %v408 = vpop.f32.mrf.mxu0
  %v409 = vadd.f32 0.0, %v408
  %v410 = vpop.f32.mrf.mxu0
  %411 = vdwg.mxu0
  %v412 = vld [vmem:[%s5] sm:$0x1]
  %v414 = vlaneseq
  %v415 = vshrl.u32 %v414, 7
  %v416 = vsub.s32 0, %v415
  %v417 = vrot.slane %v412, %v416
  %419 = vmatprep.subr.mxu0 0.0
  %420 = vmatpush1.msra.mxu0 0.0
  %421 = vmatprep.subr.mxu0 0.0
  %422 = vmatpush1.msra.mxu0 0.0
  %423 = vmatprep.subr.mxu0 0.0
  %424 = vmatpush1.msra.mxu0 0.0
  %425 = vmatprep.subr.mxu0 0.0
  %426 = vmatpush1.msra.mxu0 0.0
  %427 = vmatprep.subr.mxu0 0.0
  %428 = vmatpush1.msra.mxu0 0.0
  %429 = vmatprep.subr.mxu0 0.0
  %430 = vmatpush1.msra.mxu0 0.0
  %431 = vmatprep.subr.mxu0 0.0
  %432 = vmatpush1.msra.mxu0 0.0
  %433 = vmatprep.subr.mxu0 0.0
  %434 = vmatpush1.msra.mxu0 0.0
  %435 = vmatprep.subr.mxu0 0.0
  %436 = vmatpush1.msra.mxu0 0.0
  %437 = vmatprep.subr.mxu0 0.0
  %438 = vmatpush1.msra.mxu0 0.0
  %439 = vmatprep.subr.mxu0 0.0
  %440 = vmatpush1.msra.mxu0 0.0
  %441 = vmatprep.subr.mxu0 0.0
  %442 = vmatpush1.msra.mxu0 0.0
  %443 = vmatprep.subr.mxu0 0.0
  %444 = vmatpush1.msra.mxu0 0.0
  %445 = vmatprep.subr.mxu0 0.0
  %446 = vmatpush1.msra.mxu0 0.0
  %447 = vmatprep.subr.mxu0 0.0
  %448 = vmatpush1.msra.mxu0 %v379
  %449 = vmatprep.subr.mxu0 0.0
  %450 = vmatpush1.msra.mxu0 %v374
  %451 = vmatprep.subr.mxu0 0.0
  %452 = vmatpush2.msra.mxu0 0.0
  %453 = vmatprep.subr.mxu0 0.0
  %454 = vmatpush2.msra.mxu0 0.0
  %455 = vmatprep.subr.mxu0 0.0
  %456 = vmatpush2.msra.mxu0 0.0
  %457 = vmatprep.subr.mxu0 0.0
  %458 = vmatpush2.msra.mxu0 0.0
  %459 = vmatprep.subr.mxu0 0.0
  %460 = vmatpush2.msra.mxu0 0.0
  %461 = vmatprep.subr.mxu0 0.0
  %462 = vmatpush2.msra.mxu0 0.0
  %463 = vmatprep.subr.mxu0 0.0
  %464 = vmatpush2.msra.mxu0 0.0
  %465 = vmatprep.subr.mxu0 0.0
  %466 = vmatpush2.msra.mxu0 0.0
  %467 = vmatprep.subr.mxu0 0.0
  %468 = vmatpush2.msra.mxu0 0.0
  %469 = vmatprep.subr.mxu0 0.0
  %470 = vmatpush2.msra.mxu0 0.0
  %471 = vmatprep.subr.mxu0 0.0
  %472 = vmatpush2.msra.mxu0 0.0
  %473 = vmatprep.subr.mxu0 0.0
  %474 = vmatpush2.msra.mxu0 0.0
  %475 = vmatprep.subr.mxu0 0.0
  %476 = vmatpush2.msra.mxu0 0.0
  %477 = vmatprep.subr.mxu0 0.0
  %478 = vmatpush2.msra.mxu0 0.0
  %479 = vmatprep.subr.mxu0 0.0
  %480 = vmatpush2.msra.mxu0 0.0
  %481 = vmatprep.subr.mxu0 0.0
  %482 = vmatpush2.msra.mxu0 0.0
  %483 = vmatprep.mubr.f32.mxu0 0.0
  %484 = vmatmul.mubr.f32.gmra.mxu0 %v145
  %v485 = vpop.f32.mrf.mxu0
  %v486 = vadd.f32 %v417, %v485
  %v487 = vpop.f32.mrf.mxu0
  %488 = vmatprep.mubr.f32.mxu0 0.0
  %489 = vmatmul.mubr.f32.gmra.mxu0 %v148
  %v490 = vpop.f32.mrf.mxu0
  %v491 = vadd.f32 %v417, %v490
  %v492 = vpop.f32.mrf.mxu0
  %493 = vdwg.mxu0
  %494 = vmatprep.subr.mxu0 0.0
  %495 = vmatpush1.msra.mxu0 0.0
  %496 = vmatprep.subr.mxu0 0.0
  %497 = vmatpush1.msra.mxu0 0.0
  %498 = vmatprep.subr.mxu0 0.0
  %499 = vmatpush1.msra.mxu0 0.0
  %500 = vmatprep.subr.mxu0 0.0
  %501 = vmatpush1.msra.mxu0 0.0
  %502 = vmatprep.subr.mxu0 0.0
  %503 = vmatpush1.msra.mxu0 0.0
  %504 = vmatprep.subr.mxu0 0.0
  %505 = vmatpush1.msra.mxu0 0.0
  %506 = vmatprep.subr.mxu0 0.0
  %507 = vmatpush1.msra.mxu0 0.0
  %508 = vmatprep.subr.mxu0 0.0
  %509 = vmatpush1.msra.mxu0 0.0
  %510 = vmatprep.subr.mxu0 0.0
  %511 = vmatpush1.msra.mxu0 0.0
  %512 = vmatprep.subr.mxu0 0.0
  %513 = vmatpush1.msra.mxu0 0.0
  %514 = vmatprep.subr.mxu0 0.0
  %515 = vmatpush1.msra.mxu0 0.0
  %516 = vmatprep.subr.mxu0 0.0
  %517 = vmatpush1.msra.mxu0 0.0
  %518 = vmatprep.subr.mxu0 0.0
  %519 = vmatpush1.msra.mxu0 0.0
  %520 = vmatprep.subr.mxu0 0.0
  %521 = vmatpush1.msra.mxu0 0.0
  %522 = vmatprep.subr.mxu0 0.0
  %523 = vmatpush1.msra.mxu0 %v389
  %524 = vmatprep.subr.mxu0 0.0
  %525 = vmatpush1.msra.mxu0 %v384
  %526 = vmatprep.subr.mxu0 0.0
  %527 = vmatpush2.msra.mxu0 0.0
  %528 = vmatprep.subr.mxu0 0.0
  %529 = vmatpush2.msra.mxu0 0.0
  %530 = vmatprep.subr.mxu0 0.0
  %531 = vmatpush2.msra.mxu0 0.0
  %532 = vmatprep.subr.mxu0 0.0
  %533 = vmatpush2.msra.mxu0 0.0
  %534 = vmatprep.subr.mxu0 0.0
  %535 = vmatpush2.msra.mxu0 0.0
  %536 = vmatprep.subr.mxu0 0.0
  %537 = vmatpush2.msra.mxu0 0.0
  %538 = vmatprep.subr.mxu0 0.0
  %539 = vmatpush2.msra.mxu0 0.0
  %540 = vmatprep.subr.mxu0 0.0
  %541 = vmatpush2.msra.mxu0 0.0
  %542 = vmatprep.subr.mxu0 0.0
  %543 = vmatpush2.msra.mxu0 0.0
  %544 = vmatprep.subr.mxu0 0.0
  %545 = vmatpush2.msra.mxu0 0.0
  %546 = vmatprep.subr.mxu0 0.0
  %547 = vmatpush2.msra.mxu0 0.0
  %548 = vmatprep.subr.mxu0 0.0
  %549 = vmatpush2.msra.mxu0 0.0
  %550 = vmatprep.subr.mxu0 0.0
  %551 = vmatpush2.msra.mxu0 0.0
  %552 = vmatprep.subr.mxu0 0.0
  %553 = vmatpush2.msra.mxu0 0.0
  %554 = vmatprep.subr.mxu0 0.0
  %555 = vmatpush2.msra.mxu0 0.0
  %556 = vmatprep.subr.mxu0 0.0
  %557 = vmatpush2.msra.mxu0 0.0
  %558 = vmatprep.mubr.f32.mxu0 0.0
  %559 = vmatmul.mubr.f32.gmra.mxu0 %v151
  %v560 = vpop.f32.mrf.mxu0
  %v561 = vadd.f32 %v417, %v560
  %v562 = vpop.f32.mrf.mxu0
  %563 = vmatprep.mubr.f32.mxu0 0.0
  %564 = vmatmul.mubr.f32.gmra.mxu0 %v154
  %v565 = vpop.f32.mrf.mxu0
  %v566 = vadd.f32 %v417, %v565
  %v567 = vpop.f32.mrf.mxu0
  %568 = vdwg.mxu0
  %569 = vmatprep.subr.mxu0 0.0
  %570 = vmatpush1.msra.mxu0 0.0
  %571 = vmatprep.subr.mxu0 0.0
  %572 = vmatpush1.msra.mxu0 0.0
  %573 = vmatprep.subr.mxu0 0.0
  %574 = vmatpush1.msra.mxu0 0.0
  %575 = vmatprep.subr.mxu0 0.0
  %576 = vmatpush1.msra.mxu0 0.0
  %577 = vmatprep.subr.mxu0 0.0
  %578 = vmatpush1.msra.mxu0 0.0
  %579 = vmatprep.subr.mxu0 0.0
  %580 = vmatpush1.msra.mxu0 0.0
  %581 = vmatprep.subr.mxu0 0.0
  %582 = vmatpush1.msra.mxu0 0.0
  %583 = vmatprep.subr.mxu0 0.0
  %584 = vmatpush1.msra.mxu0 0.0
  %585 = vmatprep.subr.mxu0 0.0
  %586 = vmatpush1.msra.mxu0 0.0
  %587 = vmatprep.subr.mxu0 0.0
  %588 = vmatpush1.msra.mxu0 0.0
  %589 = vmatprep.subr.mxu0 0.0
  %590 = vmatpush1.msra.mxu0 0.0
  %591 = vmatprep.subr.mxu0 0.0
  %592 = vmatpush1.msra.mxu0 0.0
  %593 = vmatprep.subr.mxu0 0.0
  %594 = vmatpush1.msra.mxu0 0.0
  %595 = vmatprep.subr.mxu0 0.0
  %596 = vmatpush1.msra.mxu0 0.0
  %597 = vmatprep.subr.mxu0 0.0
  %598 = vmatpush1.msra.mxu0 %v399
  %599 = vmatprep.subr.mxu0 0.0
  %600 = vmatpush1.msra.mxu0 %v394
  %601 = vmatprep.subr.mxu0 0.0
  %602 = vmatpush2.msra.mxu0 0.0
  %603 = vmatprep.subr.mxu0 0.0
  %604 = vmatpush2.msra.mxu0 0.0
  %605 = vmatprep.subr.mxu0 0.0
  %606 = vmatpush2.msra.mxu0 0.0
  %607 = vmatprep.subr.mxu0 0.0
  %608 = vmatpush2.msra.mxu0 0.0
  %609 = vmatprep.subr.mxu0 0.0
  %610 = vmatpush2.msra.mxu0 0.0
  %611 = vmatprep.subr.mxu0 0.0
  %612 = vmatpush2.msra.mxu0 0.0
  %613 = vmatprep.subr.mxu0 0.0
  %614 = vmatpush2.msra.mxu0 0.0
  %615 = vmatprep.subr.mxu0 0.0
  %616 = vmatpush2.msra.mxu0 0.0
  %617 = vmatprep.subr.mxu0 0.0
  %618 = vmatpush2.msra.mxu0 0.0
  %619 = vmatprep.subr.mxu0 0.0
  %620 = vmatpush2.msra.mxu0 0.0
  %621 = vmatprep.subr.mxu0 0.0
  %622 = vmatpush2.msra.mxu0 0.0
  %623 = vmatprep.subr.mxu0 0.0
  %624 = vmatpush2.msra.mxu0 0.0
  %625 = vmatprep.subr.mxu0 0.0
  %626 = vmatpush2.msra.mxu0 0.0
  %627 = vmatprep.subr.mxu0 0.0
  %628 = vmatpush2.msra.mxu0 0.0
  %629 = vmatprep.subr.mxu0 0.0
  %630 = vmatpush2.msra.mxu0 0.0
  %631 = vmatprep.subr.mxu0 0.0
  %632 = vmatpush2.msra.mxu0 0.0
  %633 = vmatprep.mubr.f32.mxu0 0.0
  %634 = vmatmul.mubr.f32.gmra.mxu0 %v157
  %v635 = vpop.f32.mrf.mxu0
  %v636 = vadd.f32 %v417, %v635
  %v637 = vpop.f32.mrf.mxu0
  %638 = vmatprep.mubr.f32.mxu0 0.0
  %639 = vmatmul.mubr.f32.gmra.mxu0 %v160
  %v640 = vpop.f32.mrf.mxu0
  %v641 = vadd.f32 %v417, %v640
  %v642 = vpop.f32.mrf.mxu0
  %643 = vdwg.mxu0
  %644 = vmatprep.subr.mxu0 0.0
  %645 = vmatpush1.msra.mxu0 0.0
  %646 = vmatprep.subr.mxu0 0.0
  %647 = vmatpush1.msra.mxu0 0.0
  %648 = vmatprep.subr.mxu0 0.0
  %649 = vmatpush1.msra.mxu0 0.0
  %650 = vmatprep.subr.mxu0 0.0
  %651 = vmatpush1.msra.mxu0 0.0
  %652 = vmatprep.subr.mxu0 0.0
  %653 = vmatpush1.msra.mxu0 0.0
  %654 = vmatprep.subr.mxu0 0.0
  %655 = vmatpush1.msra.mxu0 0.0
  %656 = vmatprep.subr.mxu0 0.0
  %657 = vmatpush1.msra.mxu0 0.0
  %658 = vmatprep.subr.mxu0 0.0
  %659 = vmatpush1.msra.mxu0 0.0
  %660 = vmatprep.subr.mxu0 0.0
  %661 = vmatpush1.msra.mxu0 0.0
  %662 = vmatprep.subr.mxu0 0.0
  %663 = vmatpush1.msra.mxu0 0.0
  %664 = vmatprep.subr.mxu0 0.0
  %665 = vmatpush1.msra.mxu0 0.0
  %666 = vmatprep.subr.mxu0 0.0
  %667 = vmatpush1.msra.mxu0 0.0
  %668 = vmatprep.subr.mxu0 0.0
  %669 = vmatpush1.msra.mxu0 0.0
  %670 = vmatprep.subr.mxu0 0.0
  %671 = vmatpush1.msra.mxu0 0.0
  %672 = vmatprep.subr.mxu0 0.0
  %673 = vmatpush1.msra.mxu0 %v409
  %674 = vmatprep.subr.mxu0 0.0
  %675 = vmatpush1.msra.mxu0 %v404
  %676 = vmatprep.subr.mxu0 0.0
  %677 = vmatpush2.msra.mxu0 0.0
  %678 = vmatprep.subr.mxu0 0.0
  %679 = vmatpush2.msra.mxu0 0.0
  %680 = vmatprep.subr.mxu0 0.0
  %681 = vmatpush2.msra.mxu0 0.0
  %682 = vmatprep.subr.mxu0 0.0
  %683 = vmatpush2.msra.mxu0 0.0
  %684 = vmatprep.subr.mxu0 0.0
  %685 = vmatpush2.msra.mxu0 0.0
  %686 = vmatprep.subr.mxu0 0.0
  %687 = vmatpush2.msra.mxu0 0.0
  %688 = vmatprep.subr.mxu0 0.0
  %689 = vmatpush2.msra.mxu0 0.0
  %690 = vmatprep.subr.mxu0 0.0
  %691 = vmatpush2.msra.mxu0 0.0
  %692 = vmatprep.subr.mxu0 0.0
  %693 = vmatpush2.msra.mxu0 0.0
  %694 = vmatprep.subr.mxu0 0.0
  %695 = vmatpush2.msra.mxu0 0.0
  %696 = vmatprep.subr.mxu0 0.0
  %697 = vmatpush2.msra.mxu0 0.0
  %698 = vmatprep.subr.mxu0 0.0
  %699 = vmatpush2.msra.mxu0 0.0
  %700 = vmatprep.subr.mxu0 0.0
  %701 = vmatpush2.msra.mxu0 0.0
  %702 = vmatprep.subr.mxu0 0.0
  %703 = vmatpush2.msra.mxu0 0.0
  %704 = vmatprep.subr.mxu0 0.0
  %705 = vmatpush2.msra.mxu0 0.0
  %706 = vmatprep.subr.mxu0 0.0
  %707 = vmatpush2.msra.mxu0 0.0
  %708 = vmatprep.mubr.f32.mxu0 0.0
  %709 = vmatmul.mubr.f32.gmra.mxu0 %v163
  %v710 = vpop.f32.mrf.mxu0
  %v711 = vadd.f32 %v417, %v710
  %v712 = vpop.f32.mrf.mxu0
  %713 = vmatprep.mubr.f32.mxu0 0.0
  %714 = vmatmul.mubr.f32.gmra.mxu0 %v166
  %v715 = vpop.f32.mrf.mxu0
  %v716 = vadd.f32 %v417, %v715
  %v717 = vpop.f32.mrf.mxu0
  %718 = vdwg.mxu0
  %v719 = vld [vmem:[%s11] sm:$0xf]
  %v720 = vlaneseq
  %v721 = vand.u32 %v720, 127
  %v722 = vlaneseq
  %v723 = vshrl.u32 %v722, 7
  %v724 = vmul.u32 %v723, 16
  %725 = vset.pattern.permute.xlu0 0
  %726 = vperm.xlu0 %725, %v719
  %v727 = vpop.permute.xlu0 %726
  %v728 = vadd.s32 %v724, %v727
  %vm729 = vcmp.eq.s32.totalorder %v721, %v728
  %v730 = vsel %vm729, 1, 0
  %v731 = vcvt.s32.f32 %v730
  %732 = vset.pattern.permute.xlu0 1
  %733 = vperm.xlu0 %732, %v719
  %v734 = vpop.permute.xlu0 %733
  %v735 = vadd.s32 %v724, %v734
  %vm736 = vcmp.eq.s32.totalorder %v721, %v735
  %v737 = vsel %vm736, 1, 0
  %v738 = vcvt.s32.f32 %v737
  %vm739 = vcmask 523264
  %v741 = vsel %vm739, %v731, 0
  %743 = vmatprep.subr.mxu0 0.0
  %744 = vmatpush1.msra.mxu0 0.0
  %745 = vmatprep.subr.mxu0 0.0
  %746 = vmatpush1.msra.mxu0 0.0
  %747 = vmatprep.subr.mxu0 0.0
  %748 = vmatpush1.msra.mxu0 0.0
  %749 = vmatprep.subr.mxu0 0.0
  %750 = vmatpush1.msra.mxu0 0.0
  %751 = vmatprep.subr.mxu0 0.0
  %752 = vmatpush1.msra.mxu0 0.0
  %753 = vmatprep.subr.mxu0 0.0
  %754 = vmatpush1.msra.mxu0 0.0
  %755 = vmatprep.subr.mxu0 0.0
  %756 = vmatpush1.msra.mxu0 0.0
  %757 = vmatprep.subr.mxu0 0.0
  %758 = vmatpush1.msra.mxu0 0.0
  %759 = vmatprep.subr.mxu0 0.0
  %760 = vmatpush1.msra.mxu0 %v716
  %761 = vmatprep.subr.mxu0 0.0
  %762 = vmatpush1.msra.mxu0 %v711
  %763 = vmatprep.subr.mxu0 0.0
  %764 = vmatpush1.msra.mxu0 %v641
  %765 = vmatprep.subr.mxu0 0.0
  %766 = vmatpush1.msra.mxu0 %v636
  %767 = vmatprep.subr.mxu0 0.0
  %768 = vmatpush1.msra.mxu0 %v566
  %769 = vmatprep.subr.mxu0 0.0
  %770 = vmatpush1.msra.mxu0 %v561
  %771 = vmatprep.subr.mxu0 0.0
  %772 = vmatpush1.msra.mxu0 %v491
  %773 = vmatprep.subr.mxu0 0.0
  %774 = vmatpush1.msra.mxu0 %v486
  %775 = vmatprep.subr.mxu0 0.0
  %776 = vmatpush2.msra.mxu0 0.0
  %777 = vmatprep.subr.mxu0 0.0
  %778 = vmatpush2.msra.mxu0 0.0
  %779 = vmatprep.subr.mxu0 0.0
  %780 = vmatpush2.msra.mxu0 0.0
  %781 = vmatprep.subr.mxu0 0.0
  %782 = vmatpush2.msra.mxu0 0.0
  %783 = vmatprep.subr.mxu0 0.0
  %784 = vmatpush2.msra.mxu0 0.0
  %785 = vmatprep.subr.mxu0 0.0
  %786 = vmatpush2.msra.mxu0 0.0
  %787 = vmatprep.subr.mxu0 0.0
  %788 = vmatpush2.msra.mxu0 0.0
  %789 = vmatprep.subr.mxu0 0.0
  %790 = vmatpush2.msra.mxu0 0.0
  %791 = vmatprep.subr.mxu0 0.0
  %792 = vmatpush2.msra.mxu0 0.0
  %793 = vmatprep.subr.mxu0 0.0
  %794 = vmatpush2.msra.mxu0 0.0
  %795 = vmatprep.subr.mxu0 0.0
  %796 = vmatpush2.msra.mxu0 0.0
  %797 = vmatprep.subr.mxu0 0.0
  %798 = vmatpush2.msra.mxu0 0.0
  %799 = vmatprep.subr.mxu0 0.0
  %800 = vmatpush2.msra.mxu0 0.0
  %801 = vmatprep.subr.mxu0 0.0
  %802 = vmatpush2.msra.mxu0 0.0
  %803 = vmatprep.subr.mxu0 0.0
  %804 = vmatpush2.msra.mxu0 0.0
  %805 = vmatprep.subr.mxu0 0.0
  %806 = vmatpush2.msra.mxu0 0.0
  %807 = vmatprep.mubr.f32.mxu0 0.0
  %808 = vmatmul.mubr.f32.gmra.mxu0 %v741
  %v809 = vpop.f32.mrf.mxu0
  %v810 = vadd.f32 0.0, %v809
  %v811 = vpop.f32.mrf.mxu0
  %812 = vdwg.mxu0
  %v814 = vsel %vm739, %v738, 0
  %816 = vmatprep.subr.mxu0 0.0
  %817 = vmatpush1.msra.mxu0 0.0
  %818 = vmatprep.subr.mxu0 0.0
  %819 = vmatpush1.msra.mxu0 0.0
  %820 = vmatprep.subr.mxu0 0.0
  %821 = vmatpush1.msra.mxu0 0.0
  %822 = vmatprep.subr.mxu0 0.0
  %823 = vmatpush1.msra.mxu0 0.0
  %824 = vmatprep.subr.mxu0 0.0
  %825 = vmatpush1.msra.mxu0 0.0
  %826 = vmatprep.subr.mxu0 0.0
  %827 = vmatpush1.msra.mxu0 0.0
  %828 = vmatprep.subr.mxu0 0.0
  %829 = vmatpush1.msra.mxu0 0.0
  %830 = vmatprep.subr.mxu0 0.0
  %831 = vmatpush1.msra.mxu0 0.0
  %832 = vmatprep.subr.mxu0 0.0
  %833 = vmatpush1.msra.mxu0 %v716
  %834 = vmatprep.subr.mxu0 0.0
  %835 = vmatpush1.msra.mxu0 %v711
  %836 = vmatprep.subr.mxu0 0.0
  %837 = vmatpush1.msra.mxu0 %v641
  %838 = vmatprep.subr.mxu0 0.0
  %839 = vmatpush1.msra.mxu0 %v636
  %840 = vmatprep.subr.mxu0 0.0
  %841 = vmatpush1.msra.mxu0 %v566
  %842 = vmatprep.subr.mxu0 0.0
  %843 = vmatpush1.msra.mxu0 %v561
  %844 = vmatprep.subr.mxu0 0.0
  %845 = vmatpush1.msra.mxu0 %v491
  %846 = vmatprep.subr.mxu0 0.0
  %847 = vmatpush1.msra.mxu0 %v486
  %848 = vmatprep.subr.mxu0 0.0
  %849 = vmatpush2.msra.mxu0 0.0
  %850 = vmatprep.subr.mxu0 0.0
  %851 = vmatpush2.msra.mxu0 0.0
  %852 = vmatprep.subr.mxu0 0.0
  %853 = vmatpush2.msra.mxu0 0.0
  %854 = vmatprep.subr.mxu0 0.0
  %855 = vmatpush2.msra.mxu0 0.0
  %856 = vmatprep.subr.mxu0 0.0
  %857 = vmatpush2.msra.mxu0 0.0
  %858 = vmatprep.subr.mxu0 0.0
  %859 = vmatpush2.msra.mxu0 0.0
  %860 = vmatprep.subr.mxu0 0.0
  %861 = vmatpush2.msra.mxu0 0.0
  %862 = vmatprep.subr.mxu0 0.0
  %863 = vmatpush2.msra.mxu0 0.0
  %864 = vmatprep.subr.mxu0 0.0
  %865 = vmatpush2.msra.mxu0 0.0
  %866 = vmatprep.subr.mxu0 0.0
  %867 = vmatpush2.msra.mxu0 0.0
  %868 = vmatprep.subr.mxu0 0.0
  %869 = vmatpush2.msra.mxu0 0.0
  %870 = vmatprep.subr.mxu0 0.0
  %871 = vmatpush2.msra.mxu0 0.0
  %872 = vmatprep.subr.mxu0 0.0
  %873 = vmatpush2.msra.mxu0 0.0
  %874 = vmatprep.subr.mxu0 0.0
  %875 = vmatpush2.msra.mxu0 0.0
  %876 = vmatprep.subr.mxu0 0.0
  %877 = vmatpush2.msra.mxu0 0.0
  %878 = vmatprep.subr.mxu0 0.0
  %879 = vmatpush2.msra.mxu0 0.0
  %880 = vmatprep.mubr.f32.mxu0 0.0
  %881 = vmatmul.mubr.f32.gmra.mxu0 %v814
  %v882 = vpop.f32.mrf.mxu0
  %v883 = vadd.f32 0.0, %v882
  %v884 = vpop.f32.mrf.mxu0
  %885 = vdwg.mxu0
  %v886 = vld [vmem:[%s7] sm:$0xff]
  %v887 = vld [vmem:[%s7 + $0x8] sm:$0xff]
  %v888 = vld [vmem:[%s7 + $0x10] sm:$0x7]
  %v890 = vsel %vm54, %v883, 0
  %892 = vmatprep.subr.mxu0 0.0
  %893 = vmatpush1.msra.mxu0 0.0
  %894 = vmatprep.subr.mxu0 0.0
  %895 = vmatpush1.msra.mxu0 0.0
  %896 = vmatprep.subr.mxu0 0.0
  %897 = vmatpush1.msra.mxu0 0.0
  %898 = vmatprep.subr.mxu0 0.0
  %899 = vmatpush1.msra.mxu0 0.0
  %900 = vmatprep.subr.mxu0 0.0
  %901 = vmatpush1.msra.mxu0 0.0
  %902 = vmatprep.subr.mxu0 0.0
  %903 = vmatpush1.msra.mxu0 0.0
  %904 = vmatprep.subr.mxu0 0.0
  %905 = vmatpush1.msra.mxu0 0.0
  %906 = vmatprep.subr.mxu0 0.0
  %907 = vmatpush1.msra.mxu0 0.0
  %908 = vmatprep.subr.mxu0 0.0
  %909 = vmatpush1.msra.mxu0 0.0
  %910 = vmatprep.subr.mxu0 0.0
  %911 = vmatpush1.msra.mxu0 0.0
  %912 = vmatprep.subr.mxu0 0.0
  %913 = vmatpush1.msra.mxu0 0.0
  %914 = vmatprep.subr.mxu0 0.0
  %915 = vmatpush1.msra.mxu0 0.0
  %916 = vmatprep.subr.mxu0 0.0
  %917 = vmatpush1.msra.mxu0 0.0
  %918 = vmatprep.subr.mxu0 0.0
  %919 = vmatpush1.msra.mxu0 0.0
  %920 = vmatprep.subr.mxu0 0.0
  %921 = vmatpush1.msra.mxu0 0.0
  %922 = vmatprep.subr.mxu0 0.0
  %923 = vmatpush1.msra.mxu0 %v887
  %924 = vmatprep.subr.mxu0 0.0
  %925 = vmatpush2.msra.mxu0 0.0
  %926 = vmatprep.subr.mxu0 0.0
  %927 = vmatpush2.msra.mxu0 0.0
  %928 = vmatprep.subr.mxu0 0.0
  %929 = vmatpush2.msra.mxu0 0.0
  %930 = vmatprep.subr.mxu0 0.0
  %931 = vmatpush2.msra.mxu0 0.0
  %932 = vmatprep.subr.mxu0 0.0
  %933 = vmatpush2.msra.mxu0 0.0
  %934 = vmatprep.subr.mxu0 0.0
  %935 = vmatpush2.msra.mxu0 0.0
  %936 = vmatprep.subr.mxu0 0.0
  %937 = vmatpush2.msra.mxu0 0.0
  %938 = vmatprep.subr.mxu0 0.0
  %939 = vmatpush2.msra.mxu0 0.0
  %940 = vmatprep.subr.mxu0 0.0
  %941 = vmatpush2.msra.mxu0 0.0
  %942 = vmatprep.subr.mxu0 0.0
  %943 = vmatpush2.msra.mxu0 0.0
  %944 = vmatprep.subr.mxu0 0.0
  %945 = vmatpush2.msra.mxu0 0.0
  %946 = vmatprep.subr.mxu0 0.0
  %947 = vmatpush2.msra.mxu0 0.0
  %948 = vmatprep.subr.mxu0 0.0
  %949 = vmatpush2.msra.mxu0 0.0
  %950 = vmatprep.subr.mxu0 0.0
  %951 = vmatpush2.msra.mxu0 0.0
  %952 = vmatprep.subr.mxu0 0.0
  %953 = vmatpush2.msra.mxu0 0.0
  %954 = vmatprep.subr.mxu0 0.0
  %955 = vmatpush2.msra.mxu0 0.0
  %956 = vmatprep.mubr.f32.mxu0 0.0
  %957 = vmatmul.mubr.f32.gmra.mxu0 %v890
  %v958 = vpop.f32.mrf.mxu0
  %v959 = vadd.f32 0.0, %v958
  %v960 = vpop.f32.mrf.mxu0
  %961 = vdwg.mxu0
  %v963 = vsel %vm54, %v810, 0
  %965 = vmatprep.subr.mxu0 0.0
  %966 = vmatpush1.msra.mxu0 0.0
  %967 = vmatprep.subr.mxu0 0.0
  %968 = vmatpush1.msra.mxu0 0.0
  %969 = vmatprep.subr.mxu0 0.0
  %970 = vmatpush1.msra.mxu0 0.0
  %971 = vmatprep.subr.mxu0 0.0
  %972 = vmatpush1.msra.mxu0 0.0
  %973 = vmatprep.subr.mxu0 0.0
  %974 = vmatpush1.msra.mxu0 0.0
  %975 = vmatprep.subr.mxu0 0.0
  %976 = vmatpush1.msra.mxu0 0.0
  %977 = vmatprep.subr.mxu0 0.0
  %978 = vmatpush1.msra.mxu0 0.0
  %979 = vmatprep.subr.mxu0 0.0
  %980 = vmatpush1.msra.mxu0 0.0
  %981 = vmatprep.subr.mxu0 0.0
  %982 = vmatpush1.msra.mxu0 0.0
  %983 = vmatprep.subr.mxu0 0.0
  %984 = vmatpush1.msra.mxu0 0.0
  %985 = vmatprep.subr.mxu0 0.0
  %986 = vmatpush1.msra.mxu0 0.0
  %987 = vmatprep.subr.mxu0 0.0
  %988 = vmatpush1.msra.mxu0 0.0
  %989 = vmatprep.subr.mxu0 0.0
  %990 = vmatpush1.msra.mxu0 0.0
  %991 = vmatprep.subr.mxu0 0.0
  %992 = vmatpush1.msra.mxu0 0.0
  %993 = vmatprep.subr.mxu0 0.0
  %994 = vmatpush1.msra.mxu0 0.0
  %995 = vmatprep.subr.mxu0 0.0
  %996 = vmatpush1.msra.mxu0 %v886
  %997 = vmatprep.subr.mxu0 0.0
  %998 = vmatpush2.msra.mxu0 0.0
  %999 = vmatprep.subr.mxu0 0.0
  %1000 = vmatpush2.msra.mxu0 0.0
  %1001 = vmatprep.subr.mxu0 0.0
  %1002 = vmatpush2.msra.mxu0 0.0
  %1003 = vmatprep.subr.mxu0 0.0
  %1004 = vmatpush2.msra.mxu0 0.0
  %1005 = vmatprep.subr.mxu0 0.0
  %1006 = vmatpush2.msra.mxu0 0.0
  %1007 = vmatprep.subr.mxu0 0.0
  %1008 = vmatpush2.msra.mxu0 0.0
  %1009 = vmatprep.subr.mxu0 0.0
  %1010 = vmatpush2.msra.mxu0 0.0
  %1011 = vmatprep.subr.mxu0 0.0
  %1012 = vmatpush2.msra.mxu0 0.0
  %1013 = vmatprep.subr.mxu0 0.0
  %1014 = vmatpush2.msra.mxu0 0.0
  %1015 = vmatprep.subr.mxu0 0.0
  %1016 = vmatpush2.msra.mxu0 0.0
  %1017 = vmatprep.subr.mxu0 0.0
  %1018 = vmatpush2.msra.mxu0 0.0
  %1019 = vmatprep.subr.mxu0 0.0
  %1020 = vmatpush2.msra.mxu0 0.0
  %1021 = vmatprep.subr.mxu0 0.0
  %1022 = vmatpush2.msra.mxu0 0.0
  %1023 = vmatprep.subr.mxu0 0.0
  %1024 = vmatpush2.msra.mxu0 0.0
  %1025 = vmatprep.subr.mxu0 0.0
  %1026 = vmatpush2.msra.mxu0 0.0
  %1027 = vmatprep.subr.mxu0 0.0
  %1028 = vmatpush2.msra.mxu0 0.0
  %1029 = vmatprep.mubr.f32.mxu0 0.0
  %1030 = vmatmul.mubr.f32.gmra.mxu0 %v963
  %v1031 = vpop.f32.mrf.mxu0
  %v1032 = vadd.f32 %v959, %v1031
  %v1033 = vpop.f32.mrf.mxu0
  %1034 = vdwg.mxu0
  %v1035 = vld [vmem:[%s6] sm:$0xf]
  %vm1036 = vcmask 23552
  %v1038 = vsel %vm1036, %v1035, 0
  %vm1040 = vcmask 1042432
  %v1042 = vsel %vm1040, %v888, 0
  %1044 = vmatprep.subr.mxu0 0.0
  %1045 = vmatpush1.msra.mxu0 0.0
  %1046 = vmatprep.subr.mxu0 0.0
  %1047 = vmatpush1.msra.mxu0 0.0
  %1048 = vmatprep.subr.mxu0 0.0
  %1049 = vmatpush1.msra.mxu0 0.0
  %1050 = vmatprep.subr.mxu0 0.0
  %1051 = vmatpush1.msra.mxu0 0.0
  %1052 = vmatprep.subr.mxu0 0.0
  %1053 = vmatpush1.msra.mxu0 0.0
  %1054 = vmatprep.subr.mxu0 0.0
  %1055 = vmatpush1.msra.mxu0 0.0
  %1056 = vmatprep.subr.mxu0 0.0
  %1057 = vmatpush1.msra.mxu0 0.0
  %1058 = vmatprep.subr.mxu0 0.0
  %1059 = vmatpush1.msra.mxu0 0.0
  %1060 = vmatprep.subr.mxu0 0.0
  %1061 = vmatpush1.msra.mxu0 0.0
  %1062 = vmatprep.subr.mxu0 0.0
  %1063 = vmatpush1.msra.mxu0 0.0
  %1064 = vmatprep.subr.mxu0 0.0
  %1065 = vmatpush1.msra.mxu0 0.0
  %1066 = vmatprep.subr.mxu0 0.0
  %1067 = vmatpush1.msra.mxu0 0.0
  %1068 = vmatprep.subr.mxu0 0.0
  %1069 = vmatpush1.msra.mxu0 0.0
  %1070 = vmatprep.subr.mxu0 0.0
  %1071 = vmatpush1.msra.mxu0 0.0
  %1072 = vmatprep.subr.mxu0 0.0
  %1073 = vmatpush1.msra.mxu0 0.0
  %1074 = vmatprep.subr.mxu0 0.0
  %1075 = vmatpush1.msra.mxu0 %v1042
  %1076 = vmatprep.subr.mxu0 0.0
  %1077 = vmatpush2.msra.mxu0 0.0
  %1078 = vmatprep.subr.mxu0 0.0
  %1079 = vmatpush2.msra.mxu0 0.0
  %1080 = vmatprep.subr.mxu0 0.0
  %1081 = vmatpush2.msra.mxu0 0.0
  %1082 = vmatprep.subr.mxu0 0.0
  %1083 = vmatpush2.msra.mxu0 0.0
  %1084 = vmatprep.subr.mxu0 0.0
  %1085 = vmatpush2.msra.mxu0 0.0
  %1086 = vmatprep.subr.mxu0 0.0
  %1087 = vmatpush2.msra.mxu0 0.0
  %1088 = vmatprep.subr.mxu0 0.0
  %1089 = vmatpush2.msra.mxu0 0.0
  %1090 = vmatprep.subr.mxu0 0.0
  %1091 = vmatpush2.msra.mxu0 0.0
  %1092 = vmatprep.subr.mxu0 0.0
  %1093 = vmatpush2.msra.mxu0 0.0
  %1094 = vmatprep.subr.mxu0 0.0
  %1095 = vmatpush2.msra.mxu0 0.0
  %1096 = vmatprep.subr.mxu0 0.0
  %1097 = vmatpush2.msra.mxu0 0.0
  %1098 = vmatprep.subr.mxu0 0.0
  %1099 = vmatpush2.msra.mxu0 0.0
  %1100 = vmatprep.subr.mxu0 0.0
  %1101 = vmatpush2.msra.mxu0 0.0
  %1102 = vmatprep.subr.mxu0 0.0
  %1103 = vmatpush2.msra.mxu0 0.0
  %1104 = vmatprep.subr.mxu0 0.0
  %1105 = vmatpush2.msra.mxu0 0.0
  %1106 = vmatprep.subr.mxu0 0.0
  %1107 = vmatpush2.msra.mxu0 0.0
  %1108 = vmatprep.mubr.f32.mxu0 0.0
  %1109 = vmatmul.mubr.f32.gmra.mxu0 %v1038
  %v1110 = vpop.f32.mrf.mxu0
  %v1111 = vadd.f32 0.0, %v1110
  %v1112 = vpop.f32.mrf.mxu0
  %1113 = vdwg.mxu0
  %v1114 = vadd.f32 %v1032, %v1111
  %v1115 = vld [vmem:[%s8] sm:$0x1]
  %v1117 = vlaneseq
  %v1118 = vshrl.u32 %v1117, 7
  %v1119 = vsub.s32 0, %v1118
  %v1120 = vrot.slane %v1115, %v1119
  %v1122 = vadd.f32 %v1114, %v1120
  %v1123 = vmax.f32 %v1122, 0.0
  %v1124 = vld [vmem:[%s9] sm:$0xff]
  %v1125 = vld [vmem:[%s9 + $0x8] sm:$0xff]
  %v1126 = vld [vmem:[%s9 + $0x10] sm:$0xff]
  %v1127 = vld [vmem:[%s9 + $0x18] sm:$0xff]
  %v1128 = vld [vmem:[#allocation2] sm:$0x1]
  %v1130 = vlaneseq
  %v1131 = vshrl.u32 %v1130, 7
  %v1132 = vsub.s32 0, %v1131
  %v1133 = vrot.slane %v1128, %v1132
  %vm1135 = vcmask 261120
  %v1137 = vsel %vm1135, %v1123, 0
  %1139 = vmatprep.subr.mxu0 0.0
  %1140 = vmatpush1.msra.mxu0 0.0
  %1141 = vmatprep.subr.mxu0 0.0
  %1142 = vmatpush1.msra.mxu0 0.0
  %1143 = vmatprep.subr.mxu0 0.0
  %1144 = vmatpush1.msra.mxu0 0.0
  %1145 = vmatprep.subr.mxu0 0.0
  %1146 = vmatpush1.msra.mxu0 0.0
  %1147 = vmatprep.subr.mxu0 0.0
  %1148 = vmatpush1.msra.mxu0 0.0
  %1149 = vmatprep.subr.mxu0 0.0
  %1150 = vmatpush1.msra.mxu0 0.0
  %1151 = vmatprep.subr.mxu0 0.0
  %1152 = vmatpush1.msra.mxu0 0.0
  %1153 = vmatprep.subr.mxu0 0.0
  %1154 = vmatpush1.msra.mxu0 0.0
  %1155 = vmatprep.subr.mxu0 0.0
  %1156 = vmatpush1.msra.mxu0 0.0
  %1157 = vmatprep.subr.mxu0 0.0
  %1158 = vmatpush1.msra.mxu0 0.0
  %1159 = vmatprep.subr.mxu0 0.0
  %1160 = vmatpush1.msra.mxu0 0.0
  %1161 = vmatprep.subr.mxu0 0.0
  %1162 = vmatpush1.msra.mxu0 0.0
  %1163 = vmatprep.subr.mxu0 0.0
  %1164 = vmatpush1.msra.mxu0 %v1127
  %1165 = vmatprep.subr.mxu0 0.0
  %1166 = vmatpush1.msra.mxu0 %v1126
  %1167 = vmatprep.subr.mxu0 0.0
  %1168 = vmatpush1.msra.mxu0 %v1125
  %1169 = vmatprep.subr.mxu0 0.0
  %1170 = vmatpush1.msra.mxu0 %v1124
  %1171 = vmatprep.subr.mxu0 0.0
  %1172 = vmatpush2.msra.mxu0 0.0
  %1173 = vmatprep.subr.mxu0 0.0
  %1174 = vmatpush2.msra.mxu0 0.0
  %1175 = vmatprep.subr.mxu0 0.0
  %1176 = vmatpush2.msra.mxu0 0.0
  %1177 = vmatprep.subr.mxu0 0.0
  %1178 = vmatpush2.msra.mxu0 0.0
  %1179 = vmatprep.subr.mxu0 0.0
  %1180 = vmatpush2.msra.mxu0 0.0
  %1181 = vmatprep.subr.mxu0 0.0
  %1182 = vmatpush2.msra.mxu0 0.0
  %1183 = vmatprep.subr.mxu0 0.0
  %1184 = vmatpush2.msra.mxu0 0.0
  %1185 = vmatprep.subr.mxu0 0.0
  %1186 = vmatpush2.msra.mxu0 0.0
  %1187 = vmatprep.subr.mxu0 0.0
  %1188 = vmatpush2.msra.mxu0 0.0
  %1189 = vmatprep.subr.mxu0 0.0
  %1190 = vmatpush2.msra.mxu0 0.0
  %1191 = vmatprep.subr.mxu0 0.0
  %1192 = vmatpush2.msra.mxu0 0.0
  %1193 = vmatprep.subr.mxu0 0.0
  %1194 = vmatpush2.msra.mxu0 0.0
  %1195 = vmatprep.subr.mxu0 0.0
  %1196 = vmatpush2.msra.mxu0 0.0
  %1197 = vmatprep.subr.mxu0 0.0
  %1198 = vmatpush2.msra.mxu0 0.0
  %1199 = vmatprep.subr.mxu0 0.0
  %1200 = vmatpush2.msra.mxu0 0.0
  %1201 = vmatprep.subr.mxu0 0.0
  %1202 = vmatpush2.msra.mxu0 0.0
  %1203 = vmatprep.mubr.f32.mxu0 0.0
  %1204 = vmatmul.mubr.f32.gmra.mxu0 %v1137
  %v1205 = vpop.f32.mrf.mxu0
  %v1206 = vadd.f32 %v1133, %v1205
  %v1207 = vpop.f32.mrf.mxu0
  %1208 = vdwg.mxu0
  %v1209 = vsub.f32 0.0, %v1206
  %v1210 = vmul.f32 %v1209, 1.442695
  %v1211 = vpow.pop %v1210
  %v1212 = vadd.f32 %v1211, 1.0
  %v1213 = vrcp.pop %v1212
  %v1214 = vmul.f32 1.0, %v1213
  %vm1215 = vcmask 3072
  %1216 = vst.msk [vmem:[%s12] sm:$0xf] %vm1215, %v1214
  // Predicated region
  $region50: #{tpu_custom_call.1} parent=0 // pred_check
    _
  $region51: #{tpu_custom_call.1} parent=0 // pred_check_branch
    %1218 = sbr.rel (0) target = $region53
  $region52: #{tpu_custom_call.1} parent=0 // pred_region
    _
  $region53: #{tpu_custom_call.1} parent=0 // pred_fallthru
    _
  // Predicated region
  $region54: #{tpu_custom_call.1} parent=0 // pred_check
    _
  $region55: #{tpu_custom_call.1} parent=0 // pred_check_branch
    %1220 = sbr.rel (0) target = $region57
  $region56: #{tpu_custom_call.1} parent=0 // pred_region
    _
  $region57: #{tpu_custom_call.1} parent=0 // pred_fallthru
    _

</llo_original>
